<compile_context>
chip_gen: v7x
topology: tpu7x:2x2x1
jax: 0.10.0
libtpu: 0.0.40
codegen_flags: <defaults>
</compile_context>

<pallas_src>
import functools

import jax
import jax.numpy as jnp
from jax import lax
from jax.experimental import pallas as pl
from jax.experimental.pallas import tpu as pltpu


def _round_up(x, m):
    return ((x + m - 1) // m) * m


def _choose_batch_tile(batch):
    """Lane-tile size for the batch: multiple of 128, large enough to amortize
    per-grid-step overhead, small enough that big batches still give the
    'parallel' grid axis ~8 steps (keeps both v7x TensorCores busy)."""
    b128 = _round_up(batch, 128)
    tb_payload = min(2048, b128)                 # review item 2: bigger tiles
    tb_steps = _round_up(-(-b128 // 8), 128)     # review item 3: ~8 grid steps
    return max(min(512, b128), min(tb_payload, tb_steps))


def _actor_critic_kernel(xt_ref, act_ref,
                         w1_ref, b1_ref,
                         w2a_ref, b2a_ref, w2c_ref, b2c_ref,
                         w3_ref, b3_ref, wv3_ref, bv3_ref,
                         out_ref, *, H, A):
    """One batch tile, computed in transposed (feature-rows x batch-lanes) layout.

    xt_ref : [S, TB]   state^T tile (batch along lanes)
    act_ref: [1, TB]   int32 actions
    w1_ref : [2H, S]   rows[:H] = actor W1, rows[H:] = critic Wv1 (torch [out,in])
    b1_ref : [2H, 1]
    w2a/b2a, w2c/b2c   actor / critic layer-2 weights  [H,H] / [H,1]
    w3_ref : [Ap, H]   actor output layer (rows >= A are zero padding)
    b3_ref : [Ap, 1]
    wv3_ref: [H, 1]    value-head weights as a column
    bv3_ref: [1, 1]
    out_ref: [8, TB]   row0=logprob, row1=value, row2=entropy, rows 3..7 = 0
    """
    xt = xt_ref[...]

    # ---- layer 1: both heads share the input -> one fused matmul.
    h1 = jnp.dot(w1_ref[...], xt, preferred_element_type=jnp.float32) + b1_ref[...]
    a1 = jnp.maximum(h1[:H, :], 0.0)       # actor half: ReLU only   (item 5)
    c1 = jnp.tanh(h1[H:, :])               # critic half: tanh only

    # ---- layer 2: separate matmuls, no block-diagonal zero MACs.   (item 11)
    a2 = jnp.maximum(
        jnp.dot(w2a_ref[...], a1, preferred_element_type=jnp.float32) + b2a_ref[...], 0.0)
    c2 = jnp.tanh(
        jnp.dot(w2c_ref[...], c1, preferred_element_type=jnp.float32) + b2c_ref[...])

    # ---- actor logits: only round_up(A, 8) rows, no 128-wide padding. (item 4)
    logits = jnp.dot(w3_ref[...], a2, preferred_element_type=jnp.float32) + b3_ref[...]
    # ---- state value: weighted sublane reduction of critic features.  (item 6)
    value = jnp.sum(wv3_ref[...] * c2, axis=0, keepdims=True) + bv3_ref[...]

    # ---- masked, numerically-stable softmax stats over the A valid rows.
    row = lax.broadcasted_iota(jnp.int32, logits.shape, 0)
    valid = row < A
    m = jnp.max(jnp.where(valid, logits, jnp.float32(-1e30)), axis=0, keepdims=True)
    z = logits - m
    ez = jnp.where(valid, jnp.exp(z), 0.0)      # select (not multiply) -> no 0*inf risk
    sum_ez = jnp.sum(ez, axis=0, keepdims=True)
    log_sum = jnp.log(sum_ez)

    act = act_ref[...]                           # [1, TB] int32, always < A
    onehot = (row == act).astype(jnp.float32)
    logprob = jnp.sum(onehot * z, axis=0, keepdims=True) - log_sum
    # exact divide over [1, TB] — the approx reciprocal saved nothing.   (item 7)
    entropy = log_sum - jnp.sum(ez * z, axis=0, keepdims=True) / sum_ez

    # ---- lane-dense, sublane-padded [8, TB] output tile.              (item 1)
    orow = lax.broadcasted_iota(jnp.int32, out_ref.shape, 0)
    out_ref[...] = (jnp.where(orow == 0, logprob, 0.0)
                    + jnp.where(orow == 1, value, 0.0)
                    + jnp.where(orow == 2, entropy, 0.0))


def pack_params(params):
    """Pack the 12 small PyTorch-layout tensors into kernel-layout slabs.

    Call ONCE and reuse across evaluate() calls (review item 12)."""
    f32 = lambda x: jnp.asarray(x, jnp.float32)
    H = params["w2"].shape[0]
    A = params["w3"].shape[0]
    Ap = _round_up(A, 8)

    w1f = jnp.concatenate([f32(params["w1"]), f32(params["wv1"])], axis=0)           # [2H, S]
    b1f = jnp.concatenate([f32(params["b1"]), f32(params["bv1"])], axis=0)[:, None]  # [2H, 1]
    w2a, b2a = f32(params["w2"]), f32(params["b2"])[:, None]
    w2c, b2c = f32(params["wv2"]), f32(params["bv2"])[:, None]
    w3p = jnp.zeros((Ap, H), jnp.float32).at[:A].set(f32(params["w3"]))
    b3p = jnp.zeros((Ap, 1), jnp.float32).at[:A, 0].set(f32(params["b3"]))
    wv3c = f32(params["wv3"]).reshape(H, 1)
    bv3 = f32(params["bv3"]).reshape(1, 1)
    return (w1f, b1f, w2a, b2a, w2c, b2c, w3p, b3p, wv3c, bv3)


def actor_critic_evaluate(state, action, packed, *, action_dim):
    """Pallas implementation of ActorCritic.evaluate(state, action).

    state:  [B, state_dim] float32
    action: [B] int32
    packed: output of pack_params(params)
    returns (action_logprobs [B], state_value [B], dist_entropy [B])
    """
    (w1f, b1f, w2a, b2a, w2c, b2c, w3p, b3p, wv3c, bv3) = packed
    B, S = state.shape
    H = w2a.shape[0]
    Ap = w3p.shape[0]
    A = action_dim

    TB = _choose_batch_tile(B)
    Bp = _round_up(B, TB)

    # Wrapper-side layout plumbing: batch goes along lanes.
    xT = state.astype(jnp.float32).T                       # [S, B]
    actT = action.astype(jnp.int32).reshape(1, B)          # [1, B]
    if Bp != B:
        xT = jnp.pad(xT, ((0, 0), (0, Bp - B)))
        actT = jnp.pad(actT, ((0, 0), (0, Bp - B)))

    # Explicit scoped-VMEM limit so resident weights also fit under v5e's
    # 16 MiB default (review item 10).  Actual use here is tiny.
    weight_bytes = sum(int(a.size) * 4 for a in packed)
    io_bytes = (S + 1 + 8) * TB * 4
    vmem_limit = int(min(64 * 2**20, max(32 * 2**20, 4 * (weight_bytes + io_bytes) + (2 << 20))))

    kernel = functools.partial(_actor_critic_kernel, H=H, A=A)
    batched = lambda i: (0, i)     # streamed per batch tile
    const = lambda i: (0, 0)       # VMEM-resident across the whole grid

    out = pl.pallas_call(
        kernel,
        grid=(Bp // TB,),
        in_specs=[
            pl.BlockSpec((S, TB), batched),        # state^T tile (pipelined)
            pl.BlockSpec((1, TB), batched),        # action tile
            pl.BlockSpec((2 * H, S), const),       # fused layer-1 weights
            pl.BlockSpec((2 * H, 1), const),       # fused layer-1 bias
            pl.BlockSpec((H, H), const),           # actor layer-2 W
            pl.BlockSpec((H, 1), const),           # actor layer-2 b
            pl.BlockSpec((H, H), const),           # critic layer-2 W
            pl.BlockSpec((H, 1), const),           # critic layer-2 b
            pl.BlockSpec((Ap, H), const),          # actor output W (A rows padded to 8)
            pl.BlockSpec((Ap, 1), const),          # actor output b
            pl.BlockSpec((H, 1), const),           # value head weights (column)
            pl.BlockSpec((1, 1), const),           # value head bias
        ],
        out_specs=pl.BlockSpec((8, TB), batched),
        out_shape=jax.ShapeDtypeStruct((8, Bp), jnp.float32),
        compiler_params=pltpu.CompilerParams(
            dimension_semantics=("parallel",),     # megacore batch sharding
            vmem_limit_bytes=vmem_limit),
    )(xT, actT, w1f, b1f, w2a, b2a, w2c, b2c, w3p, b3p, wv3c, bv3)

    # Contiguous row slices of the transposed output (review item 1).
    return out[0, :B], out[1, :B], out[2, :B]


def init_params(key, state_dim, action_dim, n_latent_var):
    """Deterministic init, PyTorch-Linear-style uniform(-1/sqrt(fan_in), 1/sqrt(fan_in)).

    Weights kept in torch layout [out_features, in_features]; biases [out_features]."""
    def linear(k, fan_in, fan_out):
        kw, kb = jax.random.split(k)
        bound = 1.0 / (fan_in ** 0.5)
        w = jax.random.uniform(kw, (fan_out, fan_in), jnp.float32, -bound, bound)
        b = jax.random.uniform(kb, (fan_out,), jnp.float32, -bound, bound)
        return w, b

    keys = jax.random.split(key, 6)
    w1, b1 = linear(keys[0], state_dim, n_latent_var)
    w2, b2 = linear(keys[1], n_latent_var, n_latent_var)
    w3, b3 = linear(keys[2], n_latent_var, action_dim)
    wv1, bv1 = linear(keys[3], state_dim, n_latent_var)
    wv2, bv2 = linear(keys[4], n_latent_var, n_latent_var)
    wv3, bv3 = linear(keys[5], n_latent_var, 1)
    return dict(w1=w1, b1=b1, w2=w2, b2=b2, w3=w3, b3=b3,
                wv1=wv1, bv1=bv1, wv2=wv2, bv2=bv2, wv3=wv3, bv3=bv3)


def _reference_evaluate(state, action, p):
    """Pure-JAX reference mirroring the PyTorch module (high-precision matmuls)."""
    mm = lambda x, w: jnp.matmul(x, w.T, precision=jax.lax.Precision.HIGHEST)
    h = jnp.maximum(mm(state, p["w1"]) + p["b1"], 0.0)
    h = jnp.maximum(mm(h, p["w2"]) + p["b2"], 0.0)
    logits = mm(h, p["w3"]) + p["b3"]
    log_probs = jax.nn.log_softmax(logits, axis=-1)
    probs = jax.nn.softmax(logits, axis=-1)
    lp = jnp.take_along_axis(log_probs, action[:, None], axis=-1)[:, 0]
    ent = -jnp.sum(probs * log_probs, axis=-1)
    v = jnp.tanh(mm(state, p["wv1"]) + p["bv1"])
    v = jnp.tanh(mm(v, p["wv2"]) + p["bv2"])
    val = (mm(v, p["wv3"]) + p["bv3"])[:, 0]
    return lp, val, ent


if __name__ == "__main__":
    B, STATE_DIM, ACTION_DIM, N_LATENT = 8, 16, 8, 32

    key = jax.random.PRNGKey(0)
    k_params, k_state, k_action = jax.random.split(key, 3)

    params = init_params(k_params, STATE_DIM, ACTION_DIM, N_LATENT)
    state = jax.random.normal(k_state, (B, STATE_DIM), jnp.float32)
    action = jax.random.randint(k_action, (B,), 0, ACTION_DIM, dtype=jnp.int32)

    # Pack the weight slabs ONCE and reuse them across calls (review item 12).
    packed = pack_params(params)
    evaluate = jax.jit(functools.partial(actor_critic_evaluate, action_dim=ACTION_DIM))

    logprobs, values, entropy = evaluate(state, action, packed)
    jax.block_until_ready((logprobs, values, entropy))

    ref_lp, ref_val, ref_ent = _reference_evaluate(state, action, params)
    # The kernel itself uses exact math (exact softmax divide, no approx
    # reciprocal).  The tolerance below only covers possible reduced-precision
    # bf16-pass emulation of f32 matmuls on the MXU vs. the HIGHEST-precision
    # XLA reference; typical observed error is far below it.
    assert jnp.allclose(logprobs, ref_lp, atol=1e-2, rtol=1e-2)
    assert jnp.allclose(values, ref_val, atol=1e-2, rtol=1e-2)
    assert jnp.allclose(entropy, ref_ent, atol=1e-2, rtol=1e-2)

    print("KERNEL_OK")
</pallas_src>

<mosaic_0001>
module attributes {stable_mosaic.version = 11 : i64} {
  func.func @_actor_critic_kernel(%arg0: i32, %arg1: memref<16x128xf32, #tpu.memory_space<vmem>>, %arg2: memref<1x128xi32, #tpu.memory_space<vmem>>, %arg3: memref<64x16xf32, #tpu.memory_space<vmem>>, %arg4: memref<64x1xf32, #tpu.memory_space<vmem>>, %arg5: memref<32x32xf32, #tpu.memory_space<vmem>>, %arg6: memref<32x1xf32, #tpu.memory_space<vmem>>, %arg7: memref<32x32xf32, #tpu.memory_space<vmem>>, %arg8: memref<32x1xf32, #tpu.memory_space<vmem>>, %arg9: memref<8x32xf32, #tpu.memory_space<vmem>>, %arg10: memref<8x1xf32, #tpu.memory_space<vmem>>, %arg11: memref<32x1xf32, #tpu.memory_space<vmem>>, %arg12: memref<1x1xf32, #tpu.memory_space<vmem>>, %arg13: memref<8x128xf32, #tpu.memory_space<vmem>>) attributes {dimension_semantics = [#tpu.dimension_semantics<parallel>], iteration_bounds = array<i64: 1>, scalar_prefetch = 0 : i64, scratch_operands = 0 : i64, tpu.core_type = #tpu.core_type<tc>, window_params = [{transform_indices = @transform_0, window_bounds = array<i64: 16, 128>}, {transform_indices = @transform_1, window_bounds = array<i64: 1, 128>}, {pipeline_mode = #tpu.pipeline_mode<synchronous>, transform_indices = @transform_2, window_bounds = array<i64: 64, 16>}, {pipeline_mode = #tpu.pipeline_mode<synchronous>, transform_indices = @transform_3, window_bounds = array<i64: 64, 1>}, {pipeline_mode = #tpu.pipeline_mode<synchronous>, transform_indices = @transform_4, window_bounds = array<i64: 32, 32>}, {pipeline_mode = #tpu.pipeline_mode<synchronous>, transform_indices = @transform_5, window_bounds = array<i64: 32, 1>}, {pipeline_mode = #tpu.pipeline_mode<synchronous>, transform_indices = @transform_6, window_bounds = array<i64: 32, 32>}, {pipeline_mode = #tpu.pipeline_mode<synchronous>, transform_indices = @transform_7, window_bounds = array<i64: 32, 1>}, {pipeline_mode = #tpu.pipeline_mode<synchronous>, transform_indices = @transform_8, window_bounds = array<i64: 8, 32>}, {pipeline_mode = #tpu.pipeline_mode<synchronous>, transform_indices = @transform_9, window_bounds = array<i64: 8, 1>}, {pipeline_mode = #tpu.pipeline_mode<synchronous>, transform_indices = @transform_10, window_bounds = array<i64: 32, 1>}, {pipeline_mode = #tpu.pipeline_mode<synchronous>, transform_indices = @transform_11, window_bounds = array<i64: 1, 1>}, {transform_indices = @transform_12, window_bounds = array<i64: 8, 128>}]} {
    %c0 = arith.constant 0 : index
    %c0_0 = arith.constant 0 : index
    %0 = vector.load %arg1[%c0, %c0_0] : memref<16x128xf32, #tpu.memory_space<vmem>>, vector<16x128xf32>
    %c0_1 = arith.constant 0 : index
    %c0_2 = arith.constant 0 : index
    %1 = vector.load %arg3[%c0_1, %c0_2] : memref<64x16xf32, #tpu.memory_space<vmem>>, vector<64x16xf32>
    %cst = arith.constant dense<0.000000e+00> : vector<64x128xf32>
    %2 = tpu.matmul %1, %0, %cst {dimension_numbers = #tpu.dot_dimension_numbers<[1], [0], [0], [1], [0, 0, 1, 1], [], []>} : vector<64x16xf32>, vector<16x128xf32>, vector<64x128xf32> -> vector<64x128xf32>
    %c0_3 = arith.constant 0 : index
    %c0_4 = arith.constant 0 : index
    %3 = vector.load %arg4[%c0_3, %c0_4] : memref<64x1xf32, #tpu.memory_space<vmem>>, vector<64x1xf32>
    %4 = vector.broadcast %3 : vector<64x1xf32> to vector<64x128xf32>
    %5 = arith.addf %2, %4 : vector<64x128xf32>
    %6 = vector.extract_strided_slice %5 {offsets = [0, 0], sizes = [32, 128], strides = [1, 1]} : vector<64x128xf32> to vector<32x128xf32>
    %cst_5 = arith.constant 0.000000e+00 : f32
    %7 = vector.broadcast %cst_5 : f32 to vector<32x128xf32>
    %8 = arith.maximumf %6, %7 : vector<32x128xf32>
    %9 = vector.extract_strided_slice %5 {offsets = [32, 0], sizes = [32, 128], strides = [1, 1]} : vector<64x128xf32> to vector<32x128xf32>
    %10 = math.tanh %9 : vector<32x128xf32>
    %c0_6 = arith.constant 0 : index
    %c0_7 = arith.constant 0 : index
    %11 = vector.load %arg5[%c0_6, %c0_7] : memref<32x32xf32, #tpu.memory_space<vmem>>, vector<32x32xf32>
    %cst_8 = arith.constant dense<0.000000e+00> : vector<32x128xf32>
    %12 = tpu.matmul %11, %8, %cst_8 {dimension_numbers = #tpu.dot_dimension_numbers<[1], [0], [0], [1], [0, 0, 1, 1], [], []>} : vector<32x32xf32>, vector<32x128xf32>, vector<32x128xf32> -> vector<32x128xf32>
    %c0_9 = arith.constant 0 : index
    %c0_10 = arith.constant 0 : index
    %13 = vector.load %arg6[%c0_9, %c0_10] : memref<32x1xf32, #tpu.memory_space<vmem>>, vector<32x1xf32>
    %14 = vector.broadcast %13 : vector<32x1xf32> to vector<32x128xf32>
    %15 = arith.addf %12, %14 : vector<32x128xf32>
    %cst_11 = arith.constant 0.000000e+00 : f32
    %16 = vector.broadcast %cst_11 : f32 to vector<32x128xf32>
    %17 = arith.maximumf %15, %16 : vector<32x128xf32>
    %c0_12 = arith.constant 0 : index
    %c0_13 = arith.constant 0 : index
    %18 = vector.load %arg7[%c0_12, %c0_13] : memref<32x32xf32, #tpu.memory_space<vmem>>, vector<32x32xf32>
    %cst_14 = arith.constant dense<0.000000e+00> : vector<32x128xf32>
    %19 = tpu.matmul %18, %10, %cst_14 {dimension_numbers = #tpu.dot_dimension_numbers<[1], [0], [0], [1], [0, 0, 1, 1], [], []>} : vector<32x32xf32>, vector<32x128xf32>, vector<32x128xf32> -> vector<32x128xf32>
    %c0_15 = arith.constant 0 : index
    %c0_16 = arith.constant 0 : index
    %20 = vector.load %arg8[%c0_15, %c0_16] : memref<32x1xf32, #tpu.memory_space<vmem>>, vector<32x1xf32>
    %21 = vector.broadcast %20 : vector<32x1xf32> to vector<32x128xf32>
    %22 = arith.addf %19, %21 : vector<32x128xf32>
    %23 = math.tanh %22 : vector<32x128xf32>
    %c0_17 = arith.constant 0 : index
    %c0_18 = arith.constant 0 : index
    %24 = vector.load %arg9[%c0_17, %c0_18] : memref<8x32xf32, #tpu.memory_space<vmem>>, vector<8x32xf32>
    %cst_19 = arith.constant dense<0.000000e+00> : vector<8x128xf32>
    %25 = tpu.matmul %24, %17, %cst_19 {dimension_numbers = #tpu.dot_dimension_numbers<[1], [0], [0], [1], [0, 0, 1, 1], [], []>} : vector<8x32xf32>, vector<32x128xf32>, vector<8x128xf32> -> vector<8x128xf32>
    %c0_20 = arith.constant 0 : index
    %c0_21 = arith.constant 0 : index
    %26 = vector.load %arg10[%c0_20, %c0_21] : memref<8x1xf32, #tpu.memory_space<vmem>>, vector<8x1xf32>
    %27 = vector.broadcast %26 : vector<8x1xf32> to vector<8x128xf32>
    %28 = arith.addf %25, %27 : vector<8x128xf32>
    %c0_22 = arith.constant 0 : index
    %c0_23 = arith.constant 0 : index
    %29 = vector.load %arg11[%c0_22, %c0_23] : memref<32x1xf32, #tpu.memory_space<vmem>>, vector<32x1xf32>
    %30 = vector.broadcast %29 : vector<32x1xf32> to vector<32x128xf32>
    %31 = arith.mulf %30, %23 : vector<32x128xf32>
    %cst_24 = arith.constant dense<0.000000e+00> : vector<128xf32>
    %32 = vector.multi_reduction <add>, %31, %cst_24 [0] : vector<32x128xf32> to vector<128xf32>
    %33 = vector.shape_cast %32 : vector<128xf32> to vector<1x128xf32>
    %c0_25 = arith.constant 0 : index
    %c0_26 = arith.constant 0 : index
    %34 = vector.load %arg12[%c0_25, %c0_26] : memref<1x1xf32, #tpu.memory_space<vmem>>, vector<1x1xf32>
    %35 = vector.broadcast %34 : vector<1x1xf32> to vector<1x128xf32>
    %36 = arith.addf %33, %35 : vector<1x128xf32>
    %37 = tpu.iota {dimensions = array<i32: 0>} : vector<8x128xi32>
    %c8_i32 = arith.constant 8 : i32
    %38 = vector.broadcast %c8_i32 : i32 to vector<8x128xi32>
    %39 = arith.cmpi slt, %37, %38 : vector<8x128xi32>
    %cst_27 = arith.constant -1.000000e+30 : f32
    %40 = vector.broadcast %cst_27 : f32 to vector<8x128xf32>
    %41 = arith.select %39, %28, %40 : vector<8x128xi1>, vector<8x128xf32>
    %cst_28 = arith.constant dense<0xFF800000> : vector<128xf32>
    %42 = vector.multi_reduction <maximumf>, %41, %cst_28 [0] : vector<8x128xf32> to vector<128xf32>
    %43 = vector.shape_cast %42 : vector<128xf32> to vector<1x128xf32>
    %44 = vector.broadcast %43 : vector<1x128xf32> to vector<8x128xf32>
    %45 = arith.subf %28, %44 : vector<8x128xf32>
    %46 = math.exp %45 : vector<8x128xf32>
    %cst_29 = arith.constant 0.000000e+00 : f32
    %47 = vector.broadcast %cst_29 : f32 to vector<8x128xf32>
    %48 = arith.select %39, %46, %47 : vector<8x128xi1>, vector<8x128xf32>
    %cst_30 = arith.constant dense<0.000000e+00> : vector<128xf32>
    %49 = vector.multi_reduction <add>, %48, %cst_30 [0] : vector<8x128xf32> to vector<128xf32>
    %50 = vector.shape_cast %49 : vector<128xf32> to vector<1x128xf32>
    %51 = math.log %50 : vector<1x128xf32>
    %c0_31 = arith.constant 0 : index
    %c0_32 = arith.constant 0 : index
    %52 = vector.load %arg2[%c0_31, %c0_32] : memref<1x128xi32, #tpu.memory_space<vmem>>, vector<1x128xi32>
    %53 = vector.broadcast %52 : vector<1x128xi32> to vector<8x128xi32>
    %54 = arith.cmpi eq, %37, %53 : vector<8x128xi32>
    %55 = arith.extui %54 : vector<8x128xi1> to vector<8x128xi32>
    %56 = arith.sitofp %55 : vector<8x128xi32> to vector<8x128xf32>
    %57 = arith.mulf %56, %45 : vector<8x128xf32>
    %cst_33 = arith.constant dense<0.000000e+00> : vector<128xf32>
    %58 = vector.multi_reduction <add>, %57, %cst_33 [0] : vector<8x128xf32> to vector<128xf32>
    %59 = vector.shape_cast %58 : vector<128xf32> to vector<1x128xf32>
    %60 = arith.subf %59, %51 : vector<1x128xf32>
    %61 = arith.mulf %48, %45 : vector<8x128xf32>
    %cst_34 = arith.constant dense<0.000000e+00> : vector<128xf32>
    %62 = vector.multi_reduction <add>, %61, %cst_34 [0] : vector<8x128xf32> to vector<128xf32>
    %63 = vector.shape_cast %62 : vector<128xf32> to vector<1x128xf32>
    %64 = arith.divf %63, %50 : vector<1x128xf32>
    %65 = arith.subf %51, %64 : vector<1x128xf32>
    %66 = tpu.iota {dimensions = array<i32: 0>} : vector<8x128xi32>
    %c0_i32 = arith.constant 0 : i32
    %67 = vector.broadcast %c0_i32 : i32 to vector<8x128xi32>
    %68 = arith.cmpi eq, %66, %67 : vector<8x128xi32>
    %cst_35 = arith.constant 0.000000e+00 : f32
    %69 = vector.shape_cast %60 : vector<1x128xf32> to vector<1x128xf32>
    %70 = vector.broadcast %69 : vector<1x128xf32> to vector<8x128xf32>
    %71 = vector.broadcast %cst_35 : f32 to vector<8x128xf32>
    %72 = arith.select %68, %70, %71 : vector<8x128xi1>, vector<8x128xf32>
    %c1_i32 = arith.constant 1 : i32
    %73 = vector.broadcast %c1_i32 : i32 to vector<8x128xi32>
    %74 = arith.cmpi eq, %66, %73 : vector<8x128xi32>
    %cst_36 = arith.constant 0.000000e+00 : f32
    %75 = vector.shape_cast %36 : vector<1x128xf32> to vector<1x128xf32>
    %76 = vector.broadcast %75 : vector<1x128xf32> to vector<8x128xf32>
    %77 = vector.broadcast %cst_36 : f32 to vector<8x128xf32>
    %78 = arith.select %74, %76, %77 : vector<8x128xi1>, vector<8x128xf32>
    %79 = arith.addf %72, %78 : vector<8x128xf32>
    %c2_i32 = arith.constant 2 : i32
    %80 = vector.broadcast %c2_i32 : i32 to vector<8x128xi32>
    %81 = arith.cmpi eq, %66, %80 : vector<8x128xi32>
    %cst_37 = arith.constant 0.000000e+00 : f32
    %82 = vector.shape_cast %65 : vector<1x128xf32> to vector<1x128xf32>
    %83 = vector.broadcast %82 : vector<1x128xf32> to vector<8x128xf32>
    %84 = vector.broadcast %cst_37 : f32 to vector<8x128xf32>
    %85 = arith.select %81, %83, %84 : vector<8x128xi1>, vector<8x128xf32>
    %86 = arith.addf %79, %85 : vector<8x128xf32>
    %c0_38 = arith.constant 0 : index
    %c0_39 = arith.constant 0 : index
    %87 = vector.load %arg13[%c0_38, %c0_39] : memref<8x128xf32, #tpu.memory_space<vmem>>, vector<8x128xf32>
    tpu.vector_store %arg13[%c0_38, %c0_39], %86 {strides = array<i32>} : memref<8x128xf32, #tpu.memory_space<vmem>>, vector<8x128xf32>,
    return
  }
  func.func @transform_0(%arg0: i32) -> (i32, i32) {
    %c0_i32 = arith.constant 0 : i32
    %c0_i32_0 = arith.constant 0 : i32
    return %c0_i32, %arg0 : i32, i32
  }
  func.func @transform_1(%arg0: i32) -> (i32, i32) {
    %c0_i32 = arith.constant 0 : i32
    %c0_i32_0 = arith.constant 0 : i32
    return %c0_i32, %arg0 : i32, i32
  }
  func.func @transform_2(%arg0: i32) -> (i32, i32) {
    %c0_i32 = arith.constant 0 : i32
    %c0_i32_0 = arith.constant 0 : i32
    %c0_i32_1 = arith.constant 0 : i32
    return %c0_i32, %c0_i32_0 : i32, i32
  }
  func.func @transform_3(%arg0: i32) -> (i32, i32) {
    %c0_i32 = arith.constant 0 : i32
    %c0_i32_0 = arith.constant 0 : i32
    %c0_i32_1 = arith.constant 0 : i32
    return %c0_i32, %c0_i32_0 : i32, i32
  }
  func.func @transform_4(%arg0: i32) -> (i32, i32) {
    %c0_i32 = arith.constant 0 : i32
    %c0_i32_0 = arith.constant 0 : i32
    %c0_i32_1 = arith.constant 0 : i32
    return %c0_i32, %c0_i32_0 : i32, i32
  }
  func.func @transform_5(%arg0: i32) -> (i32, i32) {
    %c0_i32 = arith.constant 0 : i32
    %c0_i32_0 = arith.constant 0 : i32
    %c0_i32_1 = arith.constant 0 : i32
    return %c0_i32, %c0_i32_0 : i32, i32
  }
  func.func @transform_6(%arg0: i32) -> (i32, i32) {
    %c0_i32 = arith.constant 0 : i32
    %c0_i32_0 = arith.constant 0 : i32
    %c0_i32_1 = arith.constant 0 : i32
    return %c0_i32, %c0_i32_0 : i32, i32
  }
  func.func @transform_7(%arg0: i32) -> (i32, i32) {
    %c0_i32 = arith.constant 0 : i32
    %c0_i32_0 = arith.constant 0 : i32
    %c0_i32_1 = arith.constant 0 : i32
    return %c0_i32, %c0_i32_0 : i32, i32
  }
  func.func @transform_8(%arg0: i32) -> (i32, i32) {
    %c0_i32 = arith.constant 0 : i32
    %c0_i32_0 = arith.constant 0 : i32
    %c0_i32_1 = arith.constant 0 : i32
    return %c0_i32, %c0_i32_0 : i32, i32
  }
  func.func @transform_9(%arg0: i32) -> (i32, i32) {
    %c0_i32 = arith.constant 0 : i32
    %c0_i32_0 = arith.constant 0 : i32
    %c0_i32_1 = arith.constant 0 : i32
    return %c0_i32, %c0_i32_0 : i32, i32
  }
  func.func @transform_10(%arg0: i32) -> (i32, i32) {
    %c0_i32 = arith.constant 0 : i32
    %c0_i32_0 = arith.constant 0 : i32
    %c0_i32_1 = arith.constant 0 : i32
    return %c0_i32, %c0_i32_0 : i32, i32
  }
  func.func @transform_11(%arg0: i32) -> (i32, i32) {
    %c0_i32 = arith.constant 0 : i32
    %c0_i32_0 = arith.constant 0 : i32
    %c0_i32_1 = arith.constant 0 : i32
    return %c0_i32, %c0_i32_0 : i32, i32
  }
  func.func @transform_12(%arg0: i32) -> (i32, i32) {
    %c0_i32 = arith.constant 0 : i32
    %c0_i32_0 = arith.constant 0 : i32
    return %c0_i32, %arg0 : i32, i32
  }
}

</mosaic_0001>

<llo_original>
// kernel: actor_critic_evaluate.1
$region0: #{actor_critic_evaluate.1}
  #allocation0 [shape = 'u32[]', space=smem, size = 0x4, offset = 0x4, fixed_abs, tag = 'smem constant byte address 0x4 - core index']
  #allocation1 [shape = 'u32[144,128]{1,0:T(1,128)}', space=vmem, size = 0x12000, scoped, tag = 'internal scratch']
  #allocation2 [shape = 'f32[1,1]{1,0:T(1,128)S(1)}', space=vmem, size = 0x200, scoped, tag = 'scoped memory for actor_critic_evaluate.1']
  %s0 = inlined_call_operand.vmem [shape: f32[16,128], index: 0, kind: input, shape index: {}]
  %s1 = inlined_call_operand.vmem [shape: s32[1,128], index: 1, kind: input, shape index: {}]
  %s2 = inlined_call_operand.vmem [shape: f32[64,16], index: 2, kind: input, shape index: {}]
  %s3 = inlined_call_operand.vmem [shape: f32[64,1], index: 3, kind: input, shape index: {}]
  %s4 = inlined_call_operand.vmem [shape: f32[32,32], index: 4, kind: input, shape index: {}]
  %s5 = inlined_call_operand.vmem [shape: f32[32,1], index: 5, kind: input, shape index: {}]
  %s6 = inlined_call_operand.vmem [shape: f32[32,32], index: 6, kind: input, shape index: {}]
  %s7 = inlined_call_operand.vmem [shape: f32[32,1], index: 7, kind: input, shape index: {}]
  %s8 = inlined_call_operand.vmem [shape: f32[8,32], index: 8, kind: input, shape index: {}]
  %s9 = inlined_call_operand.vmem [shape: f32[8,1], index: 9, kind: input, shape index: {}]
  %s10 = inlined_call_operand.vmem [shape: f32[32,1], index: 10, kind: input, shape index: {}]
  %s11 = inlined_call_operand.<no memory space> [shape: f32[1,1], index: 11, kind: input, shape index: {}]
  %s12 = inlined_call_operand.vmem [shape: f32[8,128], index: 12, kind: output, shape index: {}]
  %s13 = sld [smem:[#allocation0]]
  $region58: #{actor_critic_evaluate.1} parent=0
    _
  %s15 = ssub.s32 1, %s13
  %s16 = scalar_select 0, %s15, %s13
  %v17 = vstv %s11
  %18 = vst [vmem:[#allocation2] sm:$0x1] %v17
  // Predicated region
  $region2: #{actor_critic_evaluate.1} parent=0 // pred_check
    _
  $region3: #{actor_critic_evaluate.1} parent=0 // pred_check_branch
    %20 = sbr.rel (0) target = $region5
  $region4: #{actor_critic_evaluate.1} parent=0 // pred_region
    _
  $region5: #{actor_critic_evaluate.1} parent=0 // pred_fallthru
    _
  // Predicated region
  $region6: #{actor_critic_evaluate.1} parent=0 // pred_check
    _
  $region7: #{actor_critic_evaluate.1} parent=0 // pred_check_branch
    %22 = sbr.rel (0) target = $region9
  $region8: #{actor_critic_evaluate.1} parent=0 // pred_region
    _
  $region9: #{actor_critic_evaluate.1} parent=0 // pred_fallthru
    _
  // Predicated region
  $region10: #{actor_critic_evaluate.1} parent=0 // pred_check
    _
  $region11: #{actor_critic_evaluate.1} parent=0 // pred_check_branch
    %24 = sbr.rel (0) target = $region13
  $region12: #{actor_critic_evaluate.1} parent=0 // pred_region
    _
  $region13: #{actor_critic_evaluate.1} parent=0 // pred_fallthru
    _
  // Predicated region
  $region14: #{actor_critic_evaluate.1} parent=0 // pred_check
    _
  $region15: #{actor_critic_evaluate.1} parent=0 // pred_check_branch
    %26 = sbr.rel (0) target = $region17
  $region16: #{actor_critic_evaluate.1} parent=0 // pred_region
    _
  $region17: #{actor_critic_evaluate.1} parent=0 // pred_fallthru
    _
  // Predicated region
  $region18: #{actor_critic_evaluate.1} parent=0 // pred_check
    _
  $region19: #{actor_critic_evaluate.1} parent=0 // pred_check_branch
    %28 = sbr.rel (0) target = $region21
  $region20: #{actor_critic_evaluate.1} parent=0 // pred_region
    _
  $region21: #{actor_critic_evaluate.1} parent=0 // pred_fallthru
    _
  // Predicated region
  $region22: #{actor_critic_evaluate.1} parent=0 // pred_check
    _
  $region23: #{actor_critic_evaluate.1} parent=0 // pred_check_branch
    %30 = sbr.rel (0) target = $region25
  $region24: #{actor_critic_evaluate.1} parent=0 // pred_region
    _
  $region25: #{actor_critic_evaluate.1} parent=0 // pred_fallthru
    _
  // Predicated region
  $region26: #{actor_critic_evaluate.1} parent=0 // pred_check
    _
  $region27: #{actor_critic_evaluate.1} parent=0 // pred_check_branch
    %32 = sbr.rel (0) target = $region29
  $region28: #{actor_critic_evaluate.1} parent=0 // pred_region
    _
  $region29: #{actor_critic_evaluate.1} parent=0 // pred_fallthru
    _
  // Predicated region
  $region30: #{actor_critic_evaluate.1} parent=0 // pred_check
    _
  $region31: #{actor_critic_evaluate.1} parent=0 // pred_check_branch
    %34 = sbr.rel (0) target = $region33
  $region32: #{actor_critic_evaluate.1} parent=0 // pred_region
    _
  $region33: #{actor_critic_evaluate.1} parent=0 // pred_fallthru
    _
  // Predicated region
  $region34: #{actor_critic_evaluate.1} parent=0 // pred_check
    _
  $region35: #{actor_critic_evaluate.1} parent=0 // pred_check_branch
    %36 = sbr.rel (0) target = $region37
  $region36: #{actor_critic_evaluate.1} parent=0 // pred_region
    _
  $region37: #{actor_critic_evaluate.1} parent=0 // pred_fallthru
    _
  // Predicated region
  $region38: #{actor_critic_evaluate.1} parent=0 // pred_check
    _
  $region39: #{actor_critic_evaluate.1} parent=0 // pred_check_branch
    %38 = sbr.rel (0) target = $region41
  $region40: #{actor_critic_evaluate.1} parent=0 // pred_region
    _
  $region41: #{actor_critic_evaluate.1} parent=0 // pred_fallthru
    _
  // Predicated region
  $region42: #{actor_critic_evaluate.1} parent=0 // pred_check
    _
  $region43: #{actor_critic_evaluate.1} parent=0 // pred_check_branch
    %40 = sbr.rel (0) target = $region45
  $region44: #{actor_critic_evaluate.1} parent=0 // pred_region
    _
  $region45: #{actor_critic_evaluate.1} parent=0 // pred_fallthru
    _
  // Predicated region
  $region46: #{actor_critic_evaluate.1} parent=0 // pred_check
    _
  $region47: #{actor_critic_evaluate.1} parent=0 // pred_check_branch
    %42 = sbr.rel (0) target = $region49
  $region48: #{actor_critic_evaluate.1} parent=0 // pred_region
    _
  $region49: #{actor_critic_evaluate.1} parent=0 // pred_fallthru
    _
  %v43 = vld [vmem:[%s0] sm:$0xff]
  %v44 = vld [vmem:[%s0 + $0x8] sm:$0xff]
  %v45 = vld [vmem:[%s2] sm:$0xff]
  %v46 = vld [vmem:[%s2 + $0x8] sm:$0xff]
  %v47 = vld [vmem:[%s2 + $0x10] sm:$0xff]
  %v48 = vld [vmem:[%s2 + $0x18] sm:$0xff]
  %v49 = vld [vmem:[%s2 + $0x20] sm:$0xff]
  %v50 = vld [vmem:[%s2 + $0x28] sm:$0xff]
  %v51 = vld [vmem:[%s2 + $0x30] sm:$0xff]
  %v52 = vld [vmem:[%s2 + $0x38] sm:$0xff]
  %v53 = vld [vmem:[%s3] sm:$0xff]
  %v54 = vld [vmem:[%s3 + $0x8] sm:$0xff]
  %v55 = vld [vmem:[%s3 + $0x10] sm:$0xff]
  %v56 = vld [vmem:[%s3 + $0x18] sm:$0xff]
  %v57 = vld [vmem:[%s3 + $0x20] sm:$0xff]
  %v58 = vld [vmem:[%s3 + $0x28] sm:$0xff]
  %v59 = vld [vmem:[%s3 + $0x30] sm:$0xff]
  %v60 = vld [vmem:[%s3 + $0x38] sm:$0xff]
  %62 = vset.pattern.permute.xlu0 0
  %63 = vperm.xlu0 %62, %v53
  %v64 = vpop.permute.xlu0 %63
  %67 = vset.pattern.permute.xlu0 0
  %68 = vperm.xlu0 %67, %v54
  %v69 = vpop.permute.xlu0 %68
  %72 = vset.pattern.permute.xlu0 0
  %73 = vperm.xlu0 %72, %v55
  %v74 = vpop.permute.xlu0 %73
  %77 = vset.pattern.permute.xlu0 0
  %78 = vperm.xlu0 %77, %v56
  %v79 = vpop.permute.xlu0 %78
  %82 = vset.pattern.permute.xlu0 0
  %83 = vperm.xlu0 %82, %v57
  %v84 = vpop.permute.xlu0 %83
  %87 = vset.pattern.permute.xlu0 0
  %88 = vperm.xlu0 %87, %v58
  %v89 = vpop.permute.xlu0 %88
  %92 = vset.pattern.permute.xlu0 0
  %93 = vperm.xlu0 %92, %v59
  %v94 = vpop.permute.xlu0 %93
  %97 = vset.pattern.permute.xlu0 0
  %98 = vperm.xlu0 %97, %v60
  %v99 = vpop.permute.xlu0 %98
  %vm101 = vcmask 130048
  %v103 = vsel %vm101, %v45, 0
  %v106 = vsel %vm101, %v46, 0
  %v109 = vsel %vm101, %v47, 0
  %v112 = vsel %vm101, %v48, 0
  %v115 = vsel %vm101, %v49, 0
  %v118 = vsel %vm101, %v50, 0
  %v121 = vsel %vm101, %v51, 0
  %v124 = vsel %vm101, %v52, 0
  %126 = vmatprep.subr.mxu0 0.0
  %127 = vmatpush1.msra.mxu0 %v43
  %128 = vmatprep.subr.mxu0 0.0
  %129 = vmatpush1.msra.mxu0 %v44
  %130 = vmatprep.subr.mxu0 0.0
  %131 = vmatpush1.msra.mxu0 0.0
  %132 = vmatprep.subr.mxu0 0.0
  %133 = vmatpush1.msra.mxu0 0.0
  %134 = vmatprep.subr.mxu0 0.0
  %135 = vmatpush1.msra.mxu0 0.0
  %136 = vmatprep.subr.mxu0 0.0
  %137 = vmatpush1.msra.mxu0 0.0
  %138 = vmatprep.subr.mxu0 0.0
  %139 = vmatpush1.msra.mxu0 0.0
  %140 = vmatprep.subr.mxu0 0.0
  %141 = vmatpush1.msra.mxu0 0.0
  %142 = vmatprep.subr.mxu0 0.0
  %143 = vmatpush1.msra.mxu0 0.0
  %144 = vmatprep.subr.mxu0 0.0
  %145 = vmatpush1.msra.mxu0 0.0
  %146 = vmatprep.subr.mxu0 0.0
  %147 = vmatpush1.msra.mxu0 0.0
  %148 = vmatprep.subr.mxu0 0.0
  %149 = vmatpush1.msra.mxu0 0.0
  %150 = vmatprep.subr.mxu0 0.0
  %151 = vmatpush1.msra.mxu0 0.0
  %152 = vmatprep.subr.mxu0 0.0
  %153 = vmatpush1.msra.mxu0 0.0
  %154 = vmatprep.subr.mxu0 0.0
  %155 = vmatpush1.msra.mxu0 0.0
  %156 = vmatprep.subr.mxu0 0.0
  %157 = vmatpush1.msra.mxu0 0.0
  %158 = vmatprep.subr.mxu0 0.0
  %159 = vmatpush1.msra.mxu0 0.0
  %160 = vmatprep.subr.mxu0 0.0
  %161 = vmatpush1.msra.mxu0 0.0
  %162 = vmatprep.subr.mxu0 0.0
  %163 = vmatpush1.msra.mxu0 0.0
  %164 = vmatprep.subr.mxu0 0.0
  %165 = vmatpush1.msra.mxu0 0.0
  %166 = vmatprep.subr.mxu0 0.0
  %167 = vmatpush1.msra.mxu0 0.0
  %168 = vmatprep.subr.mxu0 0.0
  %169 = vmatpush1.msra.mxu0 0.0
  %170 = vmatprep.subr.mxu0 0.0
  %171 = vmatpush1.msra.mxu0 0.0
  %172 = vmatprep.subr.mxu0 0.0
  %173 = vmatpush1.msra.mxu0 0.0
  %174 = vmatprep.subr.mxu0 0.0
  %175 = vmatpush1.msra.mxu0 0.0
  %176 = vmatprep.subr.mxu0 0.0
  %177 = vmatpush1.msra.mxu0 0.0
  %178 = vmatprep.subr.mxu0 0.0
  %179 = vmatpush1.msra.mxu0 0.0
  %180 = vmatprep.subr.mxu0 0.0
  %181 = vmatpush1.msra.mxu0 0.0
  %182 = vmatprep.subr.mxu0 0.0
  %183 = vmatpush1.msra.mxu0 0.0
  %184 = vmatprep.subr.mxu0 0.0
  %185 = vmatpush1.msra.mxu0 0.0
  %186 = vmatprep.subr.mxu0 0.0
  %187 = vmatpush1.msra.mxu0 0.0
  %188 = vmatprep.subr.mxu0 0.0
  %189 = vmatpush1.msra.mxu0 0.0
  %190 = vmatprep.mubr.f32.mxu0 0.0
  %191 = vmatmul.mubr.f32.gmra.mrb[0].mxu0 %v103
  %v192 = vpop.f32.mrb[0].mxu0
  %v193 = vadd.f32 %v64, %v192
  %v194 = vpop.f32.mrb[0].mxu0
  %195 = vmatprep.mubr.f32.mxu0 0.0
  %196 = vmatmul.mubr.f32.gmra.mrb[0].mxu0 %v106
  %v197 = vpop.f32.mrb[0].mxu0
  %v198 = vadd.f32 %v69, %v197
  %v199 = vpop.f32.mrb[0].mxu0
  %200 = vmatprep.mubr.f32.mxu0 0.0
  %201 = vmatmul.mubr.f32.gmra.mrb[0].mxu0 %v109
  %v202 = vpop.f32.mrb[0].mxu0
  %v203 = vadd.f32 %v74, %v202
  %v204 = vpop.f32.mrb[0].mxu0
  %205 = vmatprep.mubr.f32.mxu0 0.0
  %206 = vmatmul.mubr.f32.gmra.mrb[0].mxu0 %v112
  %v207 = vpop.f32.mrb[0].mxu0
  %v208 = vadd.f32 %v79, %v207
  %v209 = vpop.f32.mrb[0].mxu0
  %210 = vmatprep.mubr.f32.mxu0 0.0
  %211 = vmatmul.mubr.f32.gmra.mrb[0].mxu0 %v115
  %v212 = vpop.f32.mrb[0].mxu0
  %v213 = vadd.f32 %v84, %v212
  %v214 = vpop.f32.mrb[0].mxu0
  %215 = vmatprep.mubr.f32.mxu0 0.0
  %216 = vmatmul.mubr.f32.gmra.mrb[0].mxu0 %v118
  %v217 = vpop.f32.mrb[0].mxu0
  %v218 = vadd.f32 %v89, %v217
  %v219 = vpop.f32.mrb[0].mxu0
  %220 = vmatprep.mubr.f32.mxu0 0.0
  %221 = vmatmul.mubr.f32.gmra.mrb[0].mxu0 %v121
  %v222 = vpop.f32.mrb[0].mxu0
  %v223 = vadd.f32 %v94, %v222
  %v224 = vpop.f32.mrb[0].mxu0
  %225 = vmatprep.mubr.f32.mxu0 0.0
  %226 = vmatmul.mubr.f32.gmra.mrb[0].mxu0 %v124
  %v227 = vpop.f32.mrb[0].mxu0
  %v228 = vadd.f32 %v99, %v227
  %v229 = vpop.f32.mrb[0].mxu0
  %230 = vdwg.mxu0
  %v231 = vmax.f32 %v193, 0.0
  %v232 = vmax.f32 %v198, 0.0
  %v233 = vmax.f32 %v203, 0.0
  %v234 = vmax.f32 %v208, 0.0
  %v235 = vtanh.pop %v213
  %v236 = vtanh.pop %v218
  %v237 = vtanh.pop %v223
  %v238 = vtanh.pop %v228
  %v239 = vld [vmem:[%s4] sm:$0xff]
  %v240 = vld [vmem:[%s4 + $0x8] sm:$0xff]
  %v241 = vld [vmem:[%s4 + $0x10] sm:$0xff]
  %v242 = vld [vmem:[%s4 + $0x18] sm:$0xff]
  %v243 = vld [vmem:[%s5] sm:$0xff]
  %v244 = vld [vmem:[%s5 + $0x8] sm:$0xff]
  %v245 = vld [vmem:[%s5 + $0x10] sm:$0xff]
  %v246 = vld [vmem:[%s5 + $0x18] sm:$0xff]
  %248 = vset.pattern.permute.xlu0 0
  %249 = vperm.xlu0 %248, %v243
  %v250 = vpop.permute.xlu0 %249
  %253 = vset.pattern.permute.xlu0 0
  %254 = vperm.xlu0 %253, %v244
  %v255 = vpop.permute.xlu0 %254
  %258 = vset.pattern.permute.xlu0 0
  %259 = vperm.xlu0 %258, %v245
  %v260 = vpop.permute.xlu0 %259
  %263 = vset.pattern.permute.xlu0 0
  %264 = vperm.xlu0 %263, %v246
  %v265 = vpop.permute.xlu0 %264
  %vm267 = vcmask 261120
  %v269 = vsel %vm267, %v239, 0
  %v272 = vsel %vm267, %v240, 0
  %v275 = vsel %vm267, %v241, 0
  %v278 = vsel %vm267, %v242, 0
  %280 = vmatprep.subr.mxu0 0.0
  %281 = vmatpush1.msra.mxu0 %v231
  %282 = vmatprep.subr.mxu0 0.0
  %283 = vmatpush1.msra.mxu0 %v232
  %284 = vmatprep.subr.mxu0 0.0
  %285 = vmatpush1.msra.mxu0 %v233
  %286 = vmatprep.subr.mxu0 0.0
  %287 = vmatpush1.msra.mxu0 %v234
  %288 = vmatprep.subr.mxu0 0.0
  %289 = vmatpush1.msra.mxu0 0.0
  %290 = vmatprep.subr.mxu0 0.0
  %291 = vmatpush1.msra.mxu0 0.0
  %292 = vmatprep.subr.mxu0 0.0
  %293 = vmatpush1.msra.mxu0 0.0
  %294 = vmatprep.subr.mxu0 0.0
  %295 = vmatpush1.msra.mxu0 0.0
  %296 = vmatprep.subr.mxu0 0.0
  %297 = vmatpush1.msra.mxu0 0.0
  %298 = vmatprep.subr.mxu0 0.0
  %299 = vmatpush1.msra.mxu0 0.0
  %300 = vmatprep.subr.mxu0 0.0
  %301 = vmatpush1.msra.mxu0 0.0
  %302 = vmatprep.subr.mxu0 0.0
  %303 = vmatpush1.msra.mxu0 0.0
  %304 = vmatprep.subr.mxu0 0.0
  %305 = vmatpush1.msra.mxu0 0.0
  %306 = vmatprep.subr.mxu0 0.0
  %307 = vmatpush1.msra.mxu0 0.0
  %308 = vmatprep.subr.mxu0 0.0
  %309 = vmatpush1.msra.mxu0 0.0
  %310 = vmatprep.subr.mxu0 0.0
  %311 = vmatpush1.msra.mxu0 0.0
  %312 = vmatprep.subr.mxu0 0.0
  %313 = vmatpush1.msra.mxu0 0.0
  %314 = vmatprep.subr.mxu0 0.0
  %315 = vmatpush1.msra.mxu0 0.0
  %316 = vmatprep.subr.mxu0 0.0
  %317 = vmatpush1.msra.mxu0 0.0
  %318 = vmatprep.subr.mxu0 0.0
  %319 = vmatpush1.msra.mxu0 0.0
  %320 = vmatprep.subr.mxu0 0.0
  %321 = vmatpush1.msra.mxu0 0.0
  %322 = vmatprep.subr.mxu0 0.0
  %323 = vmatpush1.msra.mxu0 0.0
  %324 = vmatprep.subr.mxu0 0.0
  %325 = vmatpush1.msra.mxu0 0.0
  %326 = vmatprep.subr.mxu0 0.0
  %327 = vmatpush1.msra.mxu0 0.0
  %328 = vmatprep.subr.mxu0 0.0
  %329 = vmatpush1.msra.mxu0 0.0
  %330 = vmatprep.subr.mxu0 0.0
  %331 = vmatpush1.msra.mxu0 0.0
  %332 = vmatprep.subr.mxu0 0.0
  %333 = vmatpush1.msra.mxu0 0.0
  %334 = vmatprep.subr.mxu0 0.0
  %335 = vmatpush1.msra.mxu0 0.0
  %336 = vmatprep.subr.mxu0 0.0
  %337 = vmatpush1.msra.mxu0 0.0
  %338 = vmatprep.subr.mxu0 0.0
  %339 = vmatpush1.msra.mxu0 0.0
  %340 = vmatprep.subr.mxu0 0.0
  %341 = vmatpush1.msra.mxu0 0.0
  %342 = vmatprep.subr.mxu0 0.0
  %343 = vmatpush1.msra.mxu0 0.0
  %344 = vmatprep.mubr.f32.mxu0 0.0
  %345 = vmatmul.mubr.f32.gmra.mrb[0].mxu0 %v269
  %v346 = vpop.f32.mrb[0].mxu0
  %v347 = vadd.f32 %v250, %v346
  %v348 = vpop.f32.mrb[0].mxu0
  %349 = vmatprep.mubr.f32.mxu0 0.0
  %350 = vmatmul.mubr.f32.gmra.mrb[0].mxu0 %v272
  %v351 = vpop.f32.mrb[0].mxu0
  %v352 = vadd.f32 %v255, %v351
  %v353 = vpop.f32.mrb[0].mxu0
  %354 = vmatprep.mubr.f32.mxu0 0.0
  %355 = vmatmul.mubr.f32.gmra.mrb[0].mxu0 %v275
  %v356 = vpop.f32.mrb[0].mxu0
  %v357 = vadd.f32 %v260, %v356
  %v358 = vpop.f32.mrb[0].mxu0
  %359 = vmatprep.mubr.f32.mxu0 0.0
  %360 = vmatmul.mubr.f32.gmra.mrb[0].mxu0 %v278
  %v361 = vpop.f32.mrb[0].mxu0
  %v362 = vadd.f32 %v265, %v361
  %v363 = vpop.f32.mrb[0].mxu0
  %364 = vdwg.mxu0
  %v365 = vmax.f32 %v347, 0.0
  %v366 = vmax.f32 %v352, 0.0
  %v367 = vmax.f32 %v357, 0.0
  %v368 = vmax.f32 %v362, 0.0
  %v369 = vld [vmem:[%s6] sm:$0xff]
  %v370 = vld [vmem:[%s6 + $0x8] sm:$0xff]
  %v371 = vld [vmem:[%s6 + $0x10] sm:$0xff]
  %v372 = vld [vmem:[%s6 + $0x18] sm:$0xff]
  %v373 = vld [vmem:[%s7] sm:$0xff]
  %v374 = vld [vmem:[%s7 + $0x8] sm:$0xff]
  %v375 = vld [vmem:[%s7 + $0x10] sm:$0xff]
  %v376 = vld [vmem:[%s7 + $0x18] sm:$0xff]
  %378 = vset.pattern.permute.xlu0 0
  %379 = vperm.xlu0 %378, %v373
  %v380 = vpop.permute.xlu0 %379
  %383 = vset.pattern.permute.xlu0 0
  %384 = vperm.xlu0 %383, %v374
  %v385 = vpop.permute.xlu0 %384
  %388 = vset.pattern.permute.xlu0 0
  %389 = vperm.xlu0 %388, %v375
  %v390 = vpop.permute.xlu0 %389
  %393 = vset.pattern.permute.xlu0 0
  %394 = vperm.xlu0 %393, %v376
  %v395 = vpop.permute.xlu0 %394
  %v398 = vsel %vm267, %v369, 0
  %v401 = vsel %vm267, %v370, 0
  %v404 = vsel %vm267, %v371, 0
  %v407 = vsel %vm267, %v372, 0
  %409 = vmatprep.subr.mxu0 0.0
  %410 = vmatpush1.msra.mxu0 %v235
  %411 = vmatprep.subr.mxu0 0.0
  %412 = vmatpush1.msra.mxu0 %v236
  %413 = vmatprep.subr.mxu0 0.0
  %414 = vmatpush1.msra.mxu0 %v237
  %415 = vmatprep.subr.mxu0 0.0
  %416 = vmatpush1.msra.mxu0 %v238
  %417 = vmatprep.subr.mxu0 0.0
  %418 = vmatpush1.msra.mxu0 0.0
  %419 = vmatprep.subr.mxu0 0.0
  %420 = vmatpush1.msra.mxu0 0.0
  %421 = vmatprep.subr.mxu0 0.0
  %422 = vmatpush1.msra.mxu0 0.0
  %423 = vmatprep.subr.mxu0 0.0
  %424 = vmatpush1.msra.mxu0 0.0
  %425 = vmatprep.subr.mxu0 0.0
  %426 = vmatpush1.msra.mxu0 0.0
  %427 = vmatprep.subr.mxu0 0.0
  %428 = vmatpush1.msra.mxu0 0.0
  %429 = vmatprep.subr.mxu0 0.0
  %430 = vmatpush1.msra.mxu0 0.0
  %431 = vmatprep.subr.mxu0 0.0
  %432 = vmatpush1.msra.mxu0 0.0
  %433 = vmatprep.subr.mxu0 0.0
  %434 = vmatpush1.msra.mxu0 0.0
  %435 = vmatprep.subr.mxu0 0.0
  %436 = vmatpush1.msra.mxu0 0.0
  %437 = vmatprep.subr.mxu0 0.0
  %438 = vmatpush1.msra.mxu0 0.0
  %439 = vmatprep.subr.mxu0 0.0
  %440 = vmatpush1.msra.mxu0 0.0
  %441 = vmatprep.subr.mxu0 0.0
  %442 = vmatpush1.msra.mxu0 0.0
  %443 = vmatprep.subr.mxu0 0.0
  %444 = vmatpush1.msra.mxu0 0.0
  %445 = vmatprep.subr.mxu0 0.0
  %446 = vmatpush1.msra.mxu0 0.0
  %447 = vmatprep.subr.mxu0 0.0
  %448 = vmatpush1.msra.mxu0 0.0
  %449 = vmatprep.subr.mxu0 0.0
  %450 = vmatpush1.msra.mxu0 0.0
  %451 = vmatprep.subr.mxu0 0.0
  %452 = vmatpush1.msra.mxu0 0.0
  %453 = vmatprep.subr.mxu0 0.0
  %454 = vmatpush1.msra.mxu0 0.0
  %455 = vmatprep.subr.mxu0 0.0
  %456 = vmatpush1.msra.mxu0 0.0
  %457 = vmatprep.subr.mxu0 0.0
  %458 = vmatpush1.msra.mxu0 0.0
  %459 = vmatprep.subr.mxu0 0.0
  %460 = vmatpush1.msra.mxu0 0.0
  %461 = vmatprep.subr.mxu0 0.0
  %462 = vmatpush1.msra.mxu0 0.0
  %463 = vmatprep.subr.mxu0 0.0
  %464 = vmatpush1.msra.mxu0 0.0
  %465 = vmatprep.subr.mxu0 0.0
  %466 = vmatpush1.msra.mxu0 0.0
  %467 = vmatprep.subr.mxu0 0.0
  %468 = vmatpush1.msra.mxu0 0.0
  %469 = vmatprep.subr.mxu0 0.0
  %470 = vmatpush1.msra.mxu0 0.0
  %471 = vmatprep.subr.mxu0 0.0
  %472 = vmatpush1.msra.mxu0 0.0
  %473 = vmatprep.mubr.f32.mxu0 0.0
  %474 = vmatmul.mubr.f32.gmra.mrb[0].mxu0 %v398
  %v475 = vpop.f32.mrb[0].mxu0
  %v476 = vadd.f32 %v380, %v475
  %v477 = vpop.f32.mrb[0].mxu0
  %478 = vmatprep.mubr.f32.mxu0 0.0
  %479 = vmatmul.mubr.f32.gmra.mrb[0].mxu0 %v401
  %v480 = vpop.f32.mrb[0].mxu0
  %v481 = vadd.f32 %v385, %v480
  %v482 = vpop.f32.mrb[0].mxu0
  %483 = vmatprep.mubr.f32.mxu0 0.0
  %484 = vmatmul.mubr.f32.gmra.mrb[0].mxu0 %v404
  %v485 = vpop.f32.mrb[0].mxu0
  %v486 = vadd.f32 %v390, %v485
  %v487 = vpop.f32.mrb[0].mxu0
  %488 = vmatprep.mubr.f32.mxu0 0.0
  %489 = vmatmul.mubr.f32.gmra.mrb[0].mxu0 %v407
  %v490 = vpop.f32.mrb[0].mxu0
  %v491 = vadd.f32 %v395, %v490
  %v492 = vpop.f32.mrb[0].mxu0
  %493 = vdwg.mxu0
  %v494 = vtanh.pop %v476
  %v495 = vtanh.pop %v481
  %v496 = vtanh.pop %v486
  %v497 = vtanh.pop %v491
  %v498 = vld [vmem:[%s8] sm:$0xff]
  %v499 = vld [vmem:[%s9] sm:$0xff]
  %501 = vset.pattern.permute.xlu0 0
  %502 = vperm.xlu0 %501, %v499
  %v503 = vpop.permute.xlu0 %502
  %v506 = vsel %vm267, %v498, 0
  %508 = vmatprep.subr.mxu0 0.0
  %509 = vmatpush1.msra.mxu0 %v365
  %510 = vmatprep.subr.mxu0 0.0
  %511 = vmatpush1.msra.mxu0 %v366
  %512 = vmatprep.subr.mxu0 0.0
  %513 = vmatpush1.msra.mxu0 %v367
  %514 = vmatprep.subr.mxu0 0.0
  %515 = vmatpush1.msra.mxu0 %v368
  %516 = vmatprep.subr.mxu0 0.0
  %517 = vmatpush1.msra.mxu0 0.0
  %518 = vmatprep.subr.mxu0 0.0
  %519 = vmatpush1.msra.mxu0 0.0
  %520 = vmatprep.subr.mxu0 0.0
  %521 = vmatpush1.msra.mxu0 0.0
  %522 = vmatprep.subr.mxu0 0.0
  %523 = vmatpush1.msra.mxu0 0.0
  %524 = vmatprep.subr.mxu0 0.0
  %525 = vmatpush1.msra.mxu0 0.0
  %526 = vmatprep.subr.mxu0 0.0
  %527 = vmatpush1.msra.mxu0 0.0
  %528 = vmatprep.subr.mxu0 0.0
  %529 = vmatpush1.msra.mxu0 0.0
  %530 = vmatprep.subr.mxu0 0.0
  %531 = vmatpush1.msra.mxu0 0.0
  %532 = vmatprep.subr.mxu0 0.0
  %533 = vmatpush1.msra.mxu0 0.0
  %534 = vmatprep.subr.mxu0 0.0
  %535 = vmatpush1.msra.mxu0 0.0
  %536 = vmatprep.subr.mxu0 0.0
  %537 = vmatpush1.msra.mxu0 0.0
  %538 = vmatprep.subr.mxu0 0.0
  %539 = vmatpush1.msra.mxu0 0.0
  %540 = vmatprep.subr.mxu0 0.0
  %541 = vmatpush1.msra.mxu0 0.0
  %542 = vmatprep.subr.mxu0 0.0
  %543 = vmatpush1.msra.mxu0 0.0
  %544 = vmatprep.subr.mxu0 0.0
  %545 = vmatpush1.msra.mxu0 0.0
  %546 = vmatprep.subr.mxu0 0.0
  %547 = vmatpush1.msra.mxu0 0.0
  %548 = vmatprep.subr.mxu0 0.0
  %549 = vmatpush1.msra.mxu0 0.0
  %550 = vmatprep.subr.mxu0 0.0
  %551 = vmatpush1.msra.mxu0 0.0
  %552 = vmatprep.subr.mxu0 0.0
  %553 = vmatpush1.msra.mxu0 0.0
  %554 = vmatprep.subr.mxu0 0.0
  %555 = vmatpush1.msra.mxu0 0.0
  %556 = vmatprep.subr.mxu0 0.0
  %557 = vmatpush1.msra.mxu0 0.0
  %558 = vmatprep.subr.mxu0 0.0
  %559 = vmatpush1.msra.mxu0 0.0
  %560 = vmatprep.subr.mxu0 0.0
  %561 = vmatpush1.msra.mxu0 0.0
  %562 = vmatprep.subr.mxu0 0.0
  %563 = vmatpush1.msra.mxu0 0.0
  %564 = vmatprep.subr.mxu0 0.0
  %565 = vmatpush1.msra.mxu0 0.0
  %566 = vmatprep.subr.mxu0 0.0
  %567 = vmatpush1.msra.mxu0 0.0
  %568 = vmatprep.subr.mxu0 0.0
  %569 = vmatpush1.msra.mxu0 0.0
  %570 = vmatprep.subr.mxu0 0.0
  %571 = vmatpush1.msra.mxu0 0.0
  %572 = vmatprep.mubr.f32.mxu0 0.0
  %573 = vmatmul.mubr.f32.gmra.mrb[0].mxu0 %v506
  %v574 = vpop.f32.mrb[0].mxu0
  %v575 = vadd.f32 %v503, %v574
  %v576 = vpop.f32.mrb[0].mxu0
  %577 = vdwg.mxu0
  %v578 = vld [vmem:[%s10] sm:$0xff]
  %v579 = vld [vmem:[%s10 + $0x8] sm:$0xff]
  %v580 = vld [vmem:[%s10 + $0x10] sm:$0xff]
  %v581 = vld [vmem:[%s10 + $0x18] sm:$0xff]
  %583 = vset.pattern.permute.xlu0 0
  %584 = vperm.xlu0 %583, %v578
  %v585 = vpop.permute.xlu0 %584
  %588 = vset.pattern.permute.xlu0 0
  %589 = vperm.xlu0 %588, %v579
  %v590 = vpop.permute.xlu0 %589
  %593 = vset.pattern.permute.xlu0 0
  %594 = vperm.xlu0 %593, %v580
  %v595 = vpop.permute.xlu0 %594
  %598 = vset.pattern.permute.xlu0 0
  %599 = vperm.xlu0 %598, %v581
  %v600 = vpop.permute.xlu0 %599
  %v602 = vmul.f32 %v585, %v494
  %v603 = vmul.f32 %v590, %v495
  %v604 = vmul.f32 %v595, %v496
  %v605 = vmul.f32 %v600, %v497
  %v606 = vadd.f32 %v602, %v603
  %v607 = vadd.f32 %v606, %v604
  %v608 = vadd.f32 %v607, %v605
  %v609 = vrot.slane %v608, 4
  %v610 = vadd.f32 %v608, %v609
  %v611 = vrot.slane %v610, 2
  %v612 = vadd.f32 %v610, %v611
  %v613 = vrot.slane %v612, 1
  %v614 = vadd.f32 %v612, %v613
  %v615 = vld [vmem:[#allocation2] sm:$0x1]
  %617 = vset.pattern.permute.xlu0 0
  %618 = vperm.xlu0 %617, %v615
  %v619 = vpop.permute.xlu0 %618
  %v621 = vlaneseq
  %v622 = vshrl.u32 %v621, 7
  %v623 = vsub.s32 0, %v622
  %v624 = vrot.slane %v619, %v623
  %v625 = vadd.f32 %v614, %v624
  %v626 = vlaneseq
  %v627 = vshrl.u32 %v626, 7
  %vm628 = vcmp.lt.s32.totalorder %v627, 8
  %v629 = vsel %vm628, %v575, -1e+30
  %v630 = vrot.slane %v629, 4
  %v631 = vmax.f32 %v629, %v630
  %v632 = vrot.slane %v631, 2
  %v633 = vmax.f32 %v631, %v632
  %v634 = vrot.slane %v633, 1
  %v635 = vmax.f32 %v633, %v634
  %v636 = vsub.f32 %v575, %v635
  %v637 = vmul.f32 %v636, 1.442695
  %v638 = vpow.pop %v637
  %v639 = vsel %vm628, %v638, 0.0
  %v640 = vrot.slane %v639, 4
  %v641 = vadd.f32 %v639, %v640
  %v642 = vrot.slane %v641, 2
  %v643 = vadd.f32 %v641, %v642
  %v644 = vrot.slane %v643, 1
  %v645 = vadd.f32 %v643, %v644
  %v646 = vlog2.pop %v645
  %v647 = vmul.f32 %v646, 0.6931472
  %v648 = vld [vmem:[%s1] sm:$0x1]
  %v649 = vlaneseq
  %v650 = vshrl.u32 %v649, 7
  %v651 = vsub.s32 0, %v650
  %v652 = vrot.slane %v648, %v651
  %vm653 = vcmp.eq.s32.totalorder %v627, %v652
  %v654 = vsel %vm653, 1, 0
  %v655 = vcvt.s32.f32 %v654
  %v656 = vmul.f32 %v655, %v636
  %v657 = vrot.slane %v656, 4
  %v658 = vadd.f32 %v656, %v657
  %v659 = vrot.slane %v658, 2
  %v660 = vadd.f32 %v658, %v659
  %v661 = vrot.slane %v660, 1
  %v662 = vadd.f32 %v660, %v661
  %v663 = vsub.f32 %v662, %v647
  %v664 = vmul.f32 %v639, %v636
  %v665 = vrot.slane %v664, 4
  %v666 = vadd.f32 %v664, %v665
  %v667 = vrot.slane %v666, 2
  %v668 = vadd.f32 %v666, %v667
  %v669 = vrot.slane %v668, 1
  %v670 = vadd.f32 %v668, %v669
  %v671 = vrcp.pop %v645
  %v672 = vmul.f32 %v670, %v671
  %v673 = vsub.f32 %v647, %v672
  %vm674 = vcmp.eq.s32.totalorder %v627, 0
  %v675 = vsel %vm674, %v663, 0.0
  %vm676 = vcmp.eq.s32.totalorder %v627, 1
  %v677 = vsel %vm676, %v625, 0.0
  %v678 = vadd.f32 %v675, %v677
  %vm679 = vcmp.eq.s32.totalorder %v627, 2
  %v680 = vsel %vm679, %v673, 0.0
  %v681 = vadd.f32 %v678, %v680
  %682 = vst [vmem:[%s12] sm:$0xff] %v681
  // Predicated region
  $region50: #{actor_critic_evaluate.1} parent=0 // pred_check
    _
  $region51: #{actor_critic_evaluate.1} parent=0 // pred_check_branch
    %684 = sbr.rel (0) target = $region53
  $region52: #{actor_critic_evaluate.1} parent=0 // pred_region
    _
  $region53: #{actor_critic_evaluate.1} parent=0 // pred_fallthru
    _
  // Predicated region
  $region54: #{actor_critic_evaluate.1} parent=0 // pred_check
    _
  $region55: #{actor_critic_evaluate.1} parent=0 // pred_check_branch
    %686 = sbr.rel (0) target = $region57
  $region56: #{actor_critic_evaluate.1} parent=0 // pred_region
    _
  $region57: #{actor_critic_evaluate.1} parent=0 // pred_fallthru
    _

</llo_original>
